<compile_context>
chip_gen: v7x
topology: tpu7x:2x2x1
jax: 0.10.0
libtpu: 0.0.40
codegen_flags: <defaults>
</compile_context>

<pallas_src>
import jax
import jax.numpy as jnp
from jax.experimental import pallas as pl
from jax.experimental.pallas import tpu as pltpu

GATE_LOGIT_NORMALIZER = 16.0
CLAMP_MIN = -50.0
_HIGHEST = jax.lax.Precision.HIGHEST


def _log_sigmoid(x):
    # one-sided stable form (no inf intermediates, unlike the two-branch where-form)
    return -jnp.logaddexp(0.0, -x)


def _vmem_limit(working_set_bytes):
    """Scoped-VMEM budget: ~2x the double-buffered working set, clamped to
    [32 MiB, 3/4 of physical VMEM] (128 MiB on v5e/v6e, 64 MiB on v7x)."""
    try:
        cap = pltpu.get_tpu_info().vmem_capacity_bytes
    except Exception:                                     # conservative fallback
        cap = 128 * 1024 * 1024
    return int(min(max(32 * 1024 * 1024, 2 * working_set_bytes), (cap * 3) // 4))


# ----------------------------- tiled linear kernel -----------------------------


def _linear_kernel(x_ref, w_ref, b_ref, o_ref):
    o_ref[...] = (
        jnp.dot(x_ref[...], w_ref[...], preferred_element_type=jnp.float32)
        + b_ref[...]
    )


def _fit_tile(dim, want, align):
    """Largest block <= want that is a multiple of `align` and divides `dim`
    (falling back to the always-legal full-dimension block)."""
    if dim <= want:
        return dim
    t = (want // align) * align
    while t >= align:
        if dim % t == 0:
            return t
        t -= align
    return dim


def pallas_linear(x2d, w, b, *, tm=512, tn=512):
    """y = x2d @ w + b ; f32 accumulation / f32 output, operands may be bf16.

    Row- and column-tiled: grid (N/tm, OUT/tn) with weight block (IN, tn) -- the
    full (IN, OUT) weight is never VMEM-resident, both axes shard across cores.
    TODO(synk): tile the contraction (IN) axis too for very large hidden sizes.
    """
    N, IN = x2d.shape
    OUT = w.shape[1]
    itemsize = jnp.dtype(x2d.dtype).itemsize
    sub = 8 if itemsize >= 4 else 16          # sublane alignment for the row tiles
    tm = _fit_tile(N, tm, sub)
    tn = _fit_tile(OUT, tn, 128)
    working = 2 * ((tm * IN + IN * tn) * itemsize + (tm * tn + tn) * 4)
    return pl.pallas_call(
        _linear_kernel,
        out_shape=jax.ShapeDtypeStruct((N, OUT), jnp.float32),
        grid=(N // tm, OUT // tn),
        in_specs=[
            pl.BlockSpec((tm, IN), lambda i, j: (i, 0)),
            pl.BlockSpec((IN, tn), lambda i, j: (0, j)),
            pl.BlockSpec((1, tn), lambda i, j: (0, j)),
        ],
        out_specs=pl.BlockSpec((tm, tn), lambda i, j: (i, j)),
        compiler_params=pltpu.CompilerParams(
            dimension_semantics=("parallel", "parallel"),
            vmem_limit_bytes=_vmem_limit(working),
        ),
    )(x2d, w, b)


# --------------------- chunk-parallel dual-state GLA kernel ---------------------


def _gla_chunk_kernel(alpha_ref, proj_ref, o_ref, s1_ref, s2_ref):
    """One (head-block, batch, time-chunk) grid step of the dual-state GLA.

    INVARIANT: the chunk axis must stay the innermost grid axis and be 'arbitrary';
    the persistent VMEM recurrent states are re-zeroed when program_id(2) == 0
    (start of each (head-block, batch) pair).  Head/batch axes are independent and
    may be 'parallel' (each core gets its own scratch instance).
    """
    c = pl.program_id(2)

    @pl.when(c == 0)
    def _():
        s1_ref[...] = jnp.zeros_like(s1_ref)
        s2_ref[...] = jnp.zeros_like(s2_ref)

    _, HB, T, D = proj_ref.shape            # block = (5, HB, T, D)
    # fused_recurrent_gla default scale (D**-0.5) folded into the alpha mix weights.
    scale = float(D) ** -0.5
    a0 = alpha_ref[0] * scale
    a1 = alpha_ref[1] * scale

    q = proj_ref[0]                         # (HB, T, D)
    k = proj_ref[1]
    v = proj_ref[2]

    # Causal / cumulative-sum lower-triangular helpers (shared by both gates).
    row = jax.lax.broadcasted_iota(jnp.int32, (T, T), 0)
    col = jax.lax.broadcasted_iota(jnp.int32, (T, T), 1)
    causal = row >= col                     # include the diagonal
    trilb = jnp.broadcast_to(causal.astype(jnp.float32), (HB, T, T))

    def branch(g_raw, s_ref):
        # log decay: clamp(logsigmoid(g)/16, -50), matching the reference module.
        g = jnp.maximum(_log_sigmoid(g_raw) / GATE_LOGIT_NORMALIZER, CLAMP_MIN)
        # inclusive within-chunk cumulative log decay via an MXU matmul (no cumsum).
        b = jnp.einsum("hts,hsd->htd", trilb, g,
                       precision=_HIGHEST, preferred_element_type=jnp.float32)
        db = jnp.exp(b)                     # decay from chunk start, <= 1
        qb = q * db
        # TODO(synk): exp(-b) can overflow for extreme decays; secondary chunking.
        kb = k * jnp.exp(-b)

        # inter-chunk contribution: (q*exp(b)) @ S_prev
        o = jnp.einsum("htk,hkv->htv", qb, s_ref[...],
                       precision=_HIGHEST, preferred_element_type=jnp.float32)
        # intra-chunk contribution: causal (T,T) scores then @ V (both on MXU)
        A = jnp.einsum("htk,hsk->hts", qb, kb,
                       precision=_HIGHEST, preferred_element_type=jnp.float32)
        A = jnp.where(causal[None], A, 0.0)
        o = o + jnp.einsum("hts,hsv->htv", A, v,
                           precision=_HIGHEST, preferred_element_type=jnp.float32)

        # state update, once per chunk:  S = exp(b_T) (.) S + (k*exp(b_T-b))^T @ V
        decay_chunk = db[:, T - 1, :]                   # (HB, D) = exp(b_T)
        kc = k * jnp.exp(b[:, T - 1:T, :] - b)          # exponents <= 0, safe
        s_ref[...] = (
            decay_chunk[:, :, None] * s_ref[...]
            + jnp.einsum("htk,htv->hkv", kc, v,
                         precision=_HIGHEST, preferred_element_type=jnp.float32)
        )
        return o

    o1 = branch(proj_ref[3], s1_ref)        # far gate
    o2 = branch(proj_ref[4], s2_ref)        # close gate
    # Single store per chunk (vs. per-timestep masked stores in v1).
    o_ref[...] = a0 * o1 + a1 * o2


def _pick_chunk(S):
    # Largest power-of-two chunk <= 64 dividing S; 64 keeps the (T,T) score tile and
    # exp(-b) range modest and fits v7x's 64 MiB VMEM budget comfortably.
    for t in (64, 32, 16, 8):
        if S % t == 0:
            return t
    return S   # TODO(synk): pad ragged sequences instead of a whole-seq chunk


def pallas_dual_gla(alpha, proj_t, *, head_block=None):
    """alpha: (2,) f32 softmax mixing weights.
    proj_t: (B, 5, H, S, D) f32, axis 1 = [q, k, v, gate1, gate2], head-leading so
    every in-kernel contraction is a leading-batch MXU matmul.
    Returns (B, H, S, D) f32."""
    B, five, H, S, D = proj_t.shape
    assert five == 5
    T = _pick_chunk(S)
    NC = S // T
    HB = H if head_block is None else head_block
    assert H % HB == 0
    NH = H // HB

    working = 4 * (
        2 * 5 * HB * T * D      # double-buffered input block
        + 2 * HB * T * D        # double-buffered output block
        + 2 * HB * D * D        # persistent recurrent states
        + 3 * HB * T * T        # score / mask intermediates
        + 4 * HB * T * D        # gate / decay intermediates
    )

    return pl.pallas_call(
        _gla_chunk_kernel,
        out_shape=jax.ShapeDtypeStruct((B, H, S, D), jnp.float32),
        grid=(NH, B, NC),
        in_specs=[
            pl.BlockSpec(memory_space=pltpu.MemorySpace.SMEM),        # alpha scalars
            pl.BlockSpec((None, 5, HB, T, D), lambda h, b, c: (b, 0, h, c, 0)),
        ],
        out_specs=pl.BlockSpec((None, HB, T, D), lambda h, b, c: (b, h, c, 0)),
        scratch_shapes=[
            pltpu.VMEM((HB, D, D), jnp.float32),   # recurrent state (far gate)
            pltpu.VMEM((HB, D, D), jnp.float32),   # recurrent state (close gate)
        ],
        compiler_params=pltpu.CompilerParams(
            dimension_semantics=("parallel", "parallel", "arbitrary"),
            vmem_limit_bytes=_vmem_limit(working),
        ),
    )(alpha, proj_t)


# ------------------------------ module wrapper ------------------------------


def prepare_params(params, compute_dtype=jnp.float32):
    """One-time parameter prep (hoisted out of forward per perf review):
    concatenate the five projection weights, build the gate bias row, softmax alpha,
    and (optionally) cast matmul operands to bf16 (f32 accumulation is kept)."""
    HID = params["wq"].shape[0]
    w_qkvg = jnp.concatenate(
        [params["wq"], params["wk"], params["wv"], params["wg1"], params["wg2"]],
        axis=1,
    ).astype(compute_dtype)                                # (HID, 5*HID)
    b_qkvg = jnp.concatenate(
        [jnp.zeros((1, 3 * HID), jnp.float32), params["bg1"], params["bg2"]],
        axis=1,
    ).astype(jnp.float32)                                  # (1, 5*HID)
    return {
        "num_heads": params["num_heads"],
        "compute_dtype": compute_dtype,
        "w_qkvg": w_qkvg,
        "b_qkvg": b_qkvg,
        "wo": params["wo"].astype(compute_dtype),
        "bo": jnp.zeros((1, HID), jnp.float32),
        "alpha": jax.nn.softmax(params["alpha_list"].astype(jnp.float32)),
    }


def dual_state_linear_attention(hidden_states, prep, *, head_block=None):
    B, S, HID = hidden_states.shape
    H = prep["num_heads"]
    D = HID // H
    cd = prep["compute_dtype"]

    x2d = hidden_states.reshape(B * S, HID).astype(cd)

    # Fused projection: x read from HBM once for all five projections (f32 output).
    proj = pallas_linear(x2d, prep["w_qkvg"], prep["b_qkvg"])      # (B*S, 5*HID)

    # Head-leading layout (B,5,H,S,D) so every GLA contraction is a leading-batch
    # MXU matmul (no in-kernel transposes).
    # TODO(synk): at large scale fold this XLA transpose into the projection epilogue.
    proj_t = jnp.transpose(proj.reshape(B, S, 5, H, D), (0, 2, 3, 1, 4))

    attn = pallas_dual_gla(prep["alpha"], proj_t, head_block=head_block)  # (B,H,S,D)
    attn = jnp.transpose(attn, (0, 2, 1, 3)).reshape(B * S, HID)

    out = pallas_linear(attn.astype(cd), prep["wo"], prep["bo"])
    return out.reshape(B, S, HID)


# ------------------------------ pure-JAX reference ------------------------------


def reference_forward(hidden_states, params):
    B, S, HID = hidden_states.shape
    H = params["num_heads"]
    D = HID // H
    x = hidden_states.astype(jnp.float32)

    q = x @ params["wq"]
    k = x @ params["wk"]
    v = x @ params["wv"]
    g1 = x @ params["wg1"] + params["bg1"][0]
    g2 = x @ params["wg2"] + params["bg2"][0]

    def gate(z):
        return jnp.maximum(_log_sigmoid(z) / GATE_LOGIT_NORMALIZER, CLAMP_MIN)

    g1, g2 = gate(g1), gate(g2)

    def to_bhsd(t):
        return t.reshape(B, S, H, D).transpose(0, 2, 1, 3)

    qh, kh, vh, g1h, g2h = map(to_bhsd, (q, k, v, g1, g2))
    scale = D ** -0.5

    def gla(q_, k_, v_, g_):
        def step(state, xs):
            qt, kt, vt, gt = xs
            state = jnp.exp(gt)[..., None] * state + kt[..., None] * vt[..., None, :]
            ot = jnp.einsum("bhk,bhkv->bhv", qt * scale, state)
            return state, ot

        init = jnp.zeros((B, H, D, D), jnp.float32)
        xs = tuple(jnp.moveaxis(t, 2, 0) for t in (q_, k_, v_, g_))
        _, o = jax.lax.scan(step, init, xs)
        return jnp.moveaxis(o, 0, 2)

    o1 = gla(qh, kh, vh, g1h)
    o2 = gla(qh, kh, vh, g2h)
    alpha = jax.nn.softmax(params["alpha_list"])
    attn = alpha[0] * o1 + alpha[1] * o2
    attn = attn.transpose(0, 2, 1, 3).reshape(B, S, HID)
    return attn @ params["wo"]


# ------------------------------------ main ------------------------------------


if __name__ == "__main__":
    B, S, H, D = 2, 8, 4, 16          # batch, seq, heads, head_dim
    HID = H * D                        # hidden_size = 64 ; kernel_hidden_size = D

    key = jax.random.PRNGKey(0)
    ks = jax.random.split(key, 8)

    params = {
        "num_heads": H,
        "wq": jax.random.normal(ks[0], (HID, HID), jnp.float32) * 0.05,
        "wk": jax.random.normal(ks[1], (HID, HID), jnp.float32) * 0.05,
        "wv": jax.random.normal(ks[2], (HID, HID), jnp.float32) * 0.05,
        "wo": jax.random.normal(ks[3], (HID, HID), jnp.float32) * 0.05,
        # gk_proj: nn.init.eye_ weight, zero bias (as in the module's __init__)
        "wg1": jnp.eye(HID, dtype=jnp.float32),
        "bg1": jnp.zeros((1, HID), jnp.float32),
        # gk_proj2: default (random) weight, zero bias
        "wg2": jax.random.normal(ks[4], (HID, HID), jnp.float32) * 0.05,
        "bg2": jnp.zeros((1, HID), jnp.float32),
        # alpha_list ~ U(0, 1) with num_states = 2
        "alpha_list": jax.random.uniform(ks[5], (2,), jnp.float32, 0.0, 1.0),
    }

    hidden_states = jax.random.normal(ks[6], (B, S, HID), jnp.float32)
    ref = jax.block_until_ready(reference_forward(hidden_states, params))

    # f32 operands: tight check against the pure-JAX scan reference.
    prep32 = prepare_params(params, jnp.float32)
    out = jax.block_until_ready(dual_state_linear_attention(hidden_states, prep32))
    assert out.shape == (B, S, HID)
    assert jnp.allclose(out, ref, atol=1e-4, rtol=1e-4), (
        float(jnp.max(jnp.abs(out - ref)))
    )

    # bf16 matmul operands (production path per perf review), f32 accumulation and
    # f32 gate/recurrence math -> loosened tolerance against the f32 reference.
    prep16 = prepare_params(params, jnp.bfloat16)
    out16 = jax.block_until_ready(dual_state_linear_attention(hidden_states, prep16))
    assert jnp.allclose(out16, ref, atol=2e-2, rtol=2e-2), (
        float(jnp.max(jnp.abs(out16 - ref)))
    )

    print("KERNEL_OK")
</pallas_src>

<mosaic_0001>
module attributes {stable_mosaic.version = 11 : i64} {
  func.func @_linear_kernel(%arg0: i32, %arg1: i32, %arg2: memref<16x64xf32, #tpu.memory_space<vmem>>, %arg3: memref<64x320xf32, #tpu.memory_space<vmem>>, %arg4: memref<1x320xf32, #tpu.memory_space<vmem>>, %arg5: memref<16x320xf32, #tpu.memory_space<vmem>>) attributes {dimension_semantics = [#tpu.dimension_semantics<parallel>, #tpu.dimension_semantics<parallel>], iteration_bounds = array<i64: 1, 1>, scalar_prefetch = 0 : i64, scratch_operands = 0 : i64, tpu.core_type = #tpu.core_type<tc>, window_params = [{transform_indices = @transform_0, window_bounds = array<i64: 16, 64>}, {transform_indices = @transform_1, window_bounds = array<i64: 64, 320>}, {transform_indices = @transform_2, window_bounds = array<i64: 1, 320>}, {transform_indices = @transform_3, window_bounds = array<i64: 16, 320>}]} {
    %c0 = arith.constant 0 : index
    %c0_0 = arith.constant 0 : index
    %0 = vector.load %arg2[%c0, %c0_0] : memref<16x64xf32, #tpu.memory_space<vmem>>, vector<16x64xf32>
    %c0_1 = arith.constant 0 : index
    %c0_2 = arith.constant 0 : index
    %1 = vector.load %arg3[%c0_1, %c0_2] : memref<64x320xf32, #tpu.memory_space<vmem>>, vector<64x320xf32>
    %cst = arith.constant dense<0.000000e+00> : vector<16x320xf32>
    %2 = tpu.matmul %0, %1, %cst {dimension_numbers = #tpu.dot_dimension_numbers<[1], [0], [0], [1], [0, 0, 1, 1], [], []>} : vector<16x64xf32>, vector<64x320xf32>, vector<16x320xf32> -> vector<16x320xf32>
    %c0_3 = arith.constant 0 : index
    %c0_4 = arith.constant 0 : index
    %3 = vector.load %arg4[%c0_3, %c0_4] : memref<1x320xf32, #tpu.memory_space<vmem>>, vector<1x320xf32>
    %4 = vector.broadcast %3 : vector<1x320xf32> to vector<16x320xf32>
    %5 = arith.addf %2, %4 : vector<16x320xf32>
    %c0_5 = arith.constant 0 : index
    %c0_6 = arith.constant 0 : index
    %6 = vector.load %arg5[%c0_5, %c0_6] : memref<16x320xf32, #tpu.memory_space<vmem>>, vector<16x320xf32>
    tpu.vector_store %arg5[%c0_5, %c0_6], %5 {strides = array<i32>} : memref<16x320xf32, #tpu.memory_space<vmem>>, vector<16x320xf32>,
    return
  }
  func.func @transform_0(%arg0: i32, %arg1: i32) -> (i32, i32) {
    %c0_i32 = arith.constant 0 : i32
    %c0_i32_0 = arith.constant 0 : i32
    return %arg0, %c0_i32 : i32, i32
  }
  func.func @transform_1(%arg0: i32, %arg1: i32) -> (i32, i32) {
    %c0_i32 = arith.constant 0 : i32
    %c0_i32_0 = arith.constant 0 : i32
    return %c0_i32, %arg1 : i32, i32
  }
  func.func @transform_2(%arg0: i32, %arg1: i32) -> (i32, i32) {
    %c0_i32 = arith.constant 0 : i32
    %c0_i32_0 = arith.constant 0 : i32
    return %c0_i32, %arg1 : i32, i32
  }
  func.func @transform_3(%arg0: i32, %arg1: i32) -> (i32, i32) {
    %c0_i32 = arith.constant 0 : i32
    return %arg0, %arg1 : i32, i32
  }
}

</mosaic_0001>

<llo_original>
// kernel: tpu_custom_call.1
$region0: #{tpu_custom_call.1}
  #allocation0 [shape = 'u32[]', space=smem, size = 0x4, offset = 0x4, fixed_abs, tag = 'smem constant byte address 0x4 - core index']
  #allocation1 [shape = 'u32[144,128]{1,0:T(1,128)}', space=vmem, size = 0x12000, scoped, tag = 'internal scratch']
  %s0 = inlined_call_operand.hbm [shape: f32[16,64], index: 0, kind: input, shape index: {}]
  %s1 = inlined_call_operand.hbm [shape: f32[64,320], index: 1, kind: input, shape index: {}]
  %s2 = inlined_call_operand.vmem [shape: f32[1,320], index: 2, kind: input, shape index: {}]
  %s3 = inlined_call_operand.hbm [shape: f32[16,320], index: 3, kind: output, shape index: {}]
  %s4 = sld [smem:[#allocation0]]
  $region30: #{tpu_custom_call.1} parent=0
    _
  %s6 = ssub.s32 1, %s4
  %s7 = scalar_select 0, %s6, %s4
  $region1: #{tpu_custom_call.1} parent=0
    #allocation2 [shape = 'u8[8192]{0}', space=vmem, size = 0x2000, scoped, tag = 'input window, operand 0, single buffered']
    #allocation3 [shape = 's32[1]{0}', space=sflag, size = 0x4, scoped, tag = 'scoped memory for tpu_custom_call.1']
    #allocation4 [shape = 's32[1]{0}', space=sflag, size = 0x4, scoped, tag = 'scoped memory for tpu_custom_call.1']
    #allocation5 [shape = 'u8[98304]{0}', space=vmem, size = 0x18000, scoped, tag = 'input window, operand 1, single buffered']
    #allocation6 [shape = 's32[1]{0}', space=sflag, size = 0x4, scoped, tag = 'scoped memory for tpu_custom_call.1']
    #allocation7 [shape = 'u8[24576]{0}', space=vmem, size = 0x6000, scoped, tag = 'output window, operand 0, single buffered']
    %8 = vsyncpa [#allocation3], 0
    %9 = vsyncpa [#allocation6], 0
    %10 = vsyncpa [#allocation4], 0
    // Predicated region
    $region2: #{tpu_custom_call.1} parent=1 // pred_check
      _
    $region3: #{tpu_custom_call.1} parent=1 // pred_check_branch
      %12 = sbr.rel (0) target = $region5
    $region4: #{tpu_custom_call.1} parent=1 // pred_region
      %s14 = ssub.s32 256, 256
      %15 = vsyncadd [#allocation3], %s14
      %s16 = sshll.u32 [#allocation2], 4
      %s17 = int_to_ptr.vmem [resolvable:$true] %s16
      %22 = dma.hbm_to_vmem [thread:$0]  %s0, 256, %s17, [#allocation3], 128, 128, 8
    $region5: #{tpu_custom_call.1} parent=1 // pred_fallthru
      _
    // Predicated region
    $region6: #{tpu_custom_call.1} parent=1 // pred_check
      _
    $region7: #{tpu_custom_call.1} parent=1 // pred_check_branch
      %24 = sbr.rel (0) target = $region9
    $region8: #{tpu_custom_call.1} parent=1 // pred_region
      %s26 = ssub.s32 3072, 3072
      %27 = vsyncadd [#allocation6], %s26
      %s28 = sshll.u32 [#allocation5], 4
      %s29 = int_to_ptr.vmem [resolvable:$true] %s28
      %34 = dma.hbm_to_vmem [thread:$0]  %s1, 3072, %s29, [#allocation6], 384, 384, 24
    $region9: #{tpu_custom_call.1} parent=1 // pred_fallthru
      _
    // Predicated region
    $region10: #{tpu_custom_call.1} parent=1 // pred_check
      _
    $region11: #{tpu_custom_call.1} parent=1 // pred_check_branch
      %36 = sbr.rel (0) target = $region13
    $region12: #{tpu_custom_call.1} parent=1 // pred_region
      _
    $region13: #{tpu_custom_call.1} parent=1 // pred_fallthru
      _
    // Predicated region
    $region14: #{tpu_custom_call.1} parent=1 // pred_check
      _
    $region15: #{tpu_custom_call.1} parent=1 // pred_check_branch
      %38 = sbr.rel (0) target = $region17
    $region16: #{tpu_custom_call.1} parent=1 // pred_region
      %39 = dma.done [#allocation3], 256
    $region17: #{tpu_custom_call.1} parent=1 // pred_fallthru
      _
    // Predicated region
    $region18: #{tpu_custom_call.1} parent=1 // pred_check
      _
    $region19: #{tpu_custom_call.1} parent=1 // pred_check_branch
      %41 = sbr.rel (0) target = $region21
    $region20: #{tpu_custom_call.1} parent=1 // pred_region
      %42 = dma.done [#allocation6], 3072
    $region21: #{tpu_custom_call.1} parent=1 // pred_fallthru
      _
    %v43 = vld [vmem:[#allocation2] sm:$0xff]
    %v44 = vld [vmem:[#allocation2 + $0x8] sm:$0xff]
    %v45 = vld [vmem:[#allocation5] sm:$0xff]
    %v46 = vld [vmem:[#allocation5 + $0x8] sm:$0xff]
    %v47 = vld [vmem:[#allocation5 + $0x10] sm:$0xff]
    %v48 = vld [vmem:[#allocation5 + $0x18] sm:$0xff]
    %v49 = vld [vmem:[#allocation5 + $0x20] sm:$0xff]
    %v50 = vld [vmem:[#allocation5 + $0x28] sm:$0xff]
    %v51 = vld [vmem:[#allocation5 + $0x30] sm:$0xff]
    %v52 = vld [vmem:[#allocation5 + $0x38] sm:$0xff]
    %v53 = vld [vmem:[#allocation5 + $0x40] sm:$0xff]
    %v54 = vld [vmem:[#allocation5 + $0x48] sm:$0xff]
    %v55 = vld [vmem:[#allocation5 + $0x50] sm:$0xff]
    %v56 = vld [vmem:[#allocation5 + $0x58] sm:$0xff]
    %v57 = vld [vmem:[#allocation5 + $0x60] sm:$0xff]
    %v58 = vld [vmem:[#allocation5 + $0x68] sm:$0xff]
    %v59 = vld [vmem:[#allocation5 + $0x70] sm:$0xff]
    %v60 = vld [vmem:[#allocation5 + $0x78] sm:$0xff]
    %v61 = vld [vmem:[#allocation5 + $0x80] sm:$0xff]
    %v62 = vld [vmem:[#allocation5 + $0x88] sm:$0xff]
    %v63 = vld [vmem:[#allocation5 + $0x90] sm:$0xff]
    %v64 = vld [vmem:[#allocation5 + $0x98] sm:$0xff]
    %v65 = vld [vmem:[#allocation5 + $0xa0] sm:$0xff]
    %v66 = vld [vmem:[#allocation5 + $0xa8] sm:$0xff]
    %v67 = vld [vmem:[#allocation5 + $0xb0] sm:$0xff]
    %v68 = vld [vmem:[#allocation5 + $0xb8] sm:$0xff]
    %v69 = vld [vmem:[%s2] sm:$0x7]
    %v71 = vlaneseq
    %v72 = vshrl.u32 %v71, 7
    %v73 = vsub.s32 0, %v72
    %v74 = vrot.slane %v69, %v73
    %v75 = vlaneseq
    %v76 = vshrl.u32 %v75, 7
    %v77 = vsub.s32 1, %v76
    %v78 = vrot.slane %v69, %v77
    %v79 = vlaneseq
    %v80 = vshrl.u32 %v79, 7
    %v81 = vsub.s32 2, %v80
    %v82 = vrot.slane %v69, %v81
    %vm86 = vcmask 523264
    %v88 = vsel %vm86, %v43, 0
    %v91 = vsel %vm86, %v44, 0
    %93 = vmatprep.subr.mxu0 %v46
    %94 = vmatpush1.msra.mxu0 %v45
    %95 = vmatprep.subr.mxu0 %v49
    %96 = vmatpush1.msra.mxu0 %v48
    %97 = vmatprep.subr.mxu0 %v52
    %98 = vmatpush1.msra.mxu0 %v51
    %99 = vmatprep.subr.mxu0 %v55
    %100 = vmatpush1.msra.mxu0 %v54
    %101 = vmatprep.subr.mxu0 %v58
    %102 = vmatpush1.msra.mxu0 %v57
    %103 = vmatprep.subr.mxu0 %v61
    %104 = vmatpush1.msra.mxu0 %v60
    %105 = vmatprep.subr.mxu0 %v64
    %106 = vmatpush1.msra.mxu0 %v63
    %107 = vmatprep.subr.mxu0 %v67
    %108 = vmatpush1.msra.mxu0 %v66
    %109 = vmatprep.subr.mxu0 0.0
    %110 = vmatpush1.msra.mxu0 0.0
    %111 = vmatprep.subr.mxu0 0.0
    %112 = vmatpush1.msra.mxu0 0.0
    %113 = vmatprep.subr.mxu0 0.0
    %114 = vmatpush1.msra.mxu0 0.0
    %115 = vmatprep.subr.mxu0 0.0
    %116 = vmatpush1.msra.mxu0 0.0
    %117 = vmatprep.subr.mxu0 0.0
    %118 = vmatpush1.msra.mxu0 0.0
    %119 = vmatprep.subr.mxu0 0.0
    %120 = vmatpush1.msra.mxu0 0.0
    %121 = vmatprep.subr.mxu0 0.0
    %122 = vmatpush1.msra.mxu0 0.0
    %123 = vmatprep.subr.mxu0 0.0
    %124 = vmatpush1.msra.mxu0 0.0
    %125 = vmatprep.subr.mxu0 0.0
    %126 = vmatpush1.msra.mxu0 0.0
    %127 = vmatprep.subr.mxu0 0.0
    %128 = vmatpush1.msra.mxu0 0.0
    %129 = vmatprep.subr.mxu0 0.0
    %130 = vmatpush1.msra.mxu0 0.0
    %131 = vmatprep.subr.mxu0 0.0
    %132 = vmatpush1.msra.mxu0 0.0
    %133 = vmatprep.subr.mxu0 0.0
    %134 = vmatpush1.msra.mxu0 0.0
    %135 = vmatprep.subr.mxu0 0.0
    %136 = vmatpush1.msra.mxu0 0.0
    %137 = vmatprep.subr.mxu0 0.0
    %138 = vmatpush1.msra.mxu0 0.0
    %139 = vmatprep.subr.mxu0 0.0
    %140 = vmatpush1.msra.mxu0 0.0
    %141 = vmatprep.subr.mxu0 0.0
    %142 = vmatpush1.msra.mxu0 0.0
    %143 = vmatprep.subr.mxu0 0.0
    %144 = vmatpush1.msra.mxu0 0.0
    %145 = vmatprep.subr.mxu0 0.0
    %146 = vmatpush1.msra.mxu0 0.0
    %147 = vmatprep.subr.mxu0 0.0
    %148 = vmatpush1.msra.mxu0 0.0
    %149 = vmatprep.subr.mxu0 0.0
    %150 = vmatpush1.msra.mxu0 0.0
    %151 = vmatprep.subr.mxu0 0.0
    %152 = vmatpush1.msra.mxu0 0.0
    %153 = vmatprep.subr.mxu0 0.0
    %154 = vmatpush1.msra.mxu0 0.0
    %155 = vmatprep.subr.mxu0 0.0
    %156 = vmatpush1.msra.mxu0 0.0
    %157 = vmatprep.mubr.f32.mxu0 0.0
    %158 = vmatmul.mubr.f32.gmra.mrb[0].mxu0 %v88
    %v159 = vpop.f32.mrb[0].mxu0
    %v160 = vadd.f32 %v74, %v159
    %v161 = vpop.f32.mrb[0].mxu0
    %v162 = vadd.f32 %v78, %v161
    %163 = vmatprep.mubr.f32.mxu0 0.0
    %164 = vmatmul.mubr.f32.gmra.mrb[0].mxu0 %v91
    %v165 = vpop.f32.mrb[0].mxu0
    %v166 = vadd.f32 %v74, %v165
    %v167 = vpop.f32.mrb[0].mxu0
    %v168 = vadd.f32 %v78, %v167
    %169 = vdwg.mxu0
    %170 = vmatprep.subr.mxu0 0.0
    %171 = vmatpush1.msra.mxu0 %v47
    %172 = vmatprep.subr.mxu0 0.0
    %173 = vmatpush1.msra.mxu0 %v50
    %174 = vmatprep.subr.mxu0 0.0
    %175 = vmatpush1.msra.mxu0 %v53
    %176 = vmatprep.subr.mxu0 0.0
    %177 = vmatpush1.msra.mxu0 %v56
    %178 = vmatprep.subr.mxu0 0.0
    %179 = vmatpush1.msra.mxu0 %v59
    %180 = vmatprep.subr.mxu0 0.0
    %181 = vmatpush1.msra.mxu0 %v62
    %182 = vmatprep.subr.mxu0 0.0
    %183 = vmatpush1.msra.mxu0 %v65
    %184 = vmatprep.subr.mxu0 0.0
    %185 = vmatpush1.msra.mxu0 %v68
    %186 = vmatprep.subr.mxu0 0.0
    %187 = vmatpush1.msra.mxu0 0.0
    %188 = vmatprep.subr.mxu0 0.0
    %189 = vmatpush1.msra.mxu0 0.0
    %190 = vmatprep.subr.mxu0 0.0
    %191 = vmatpush1.msra.mxu0 0.0
    %192 = vmatprep.subr.mxu0 0.0
    %193 = vmatpush1.msra.mxu0 0.0
    %194 = vmatprep.subr.mxu0 0.0
    %195 = vmatpush1.msra.mxu0 0.0
    %196 = vmatprep.subr.mxu0 0.0
    %197 = vmatpush1.msra.mxu0 0.0
    %198 = vmatprep.subr.mxu0 0.0
    %199 = vmatpush1.msra.mxu0 0.0
    %200 = vmatprep.subr.mxu0 0.0
    %201 = vmatpush1.msra.mxu0 0.0
    %202 = vmatprep.subr.mxu0 0.0
    %203 = vmatpush1.msra.mxu0 0.0
    %204 = vmatprep.subr.mxu0 0.0
    %205 = vmatpush1.msra.mxu0 0.0
    %206 = vmatprep.subr.mxu0 0.0
    %207 = vmatpush1.msra.mxu0 0.0
    %208 = vmatprep.subr.mxu0 0.0
    %209 = vmatpush1.msra.mxu0 0.0
    %210 = vmatprep.subr.mxu0 0.0
    %211 = vmatpush1.msra.mxu0 0.0
    %212 = vmatprep.subr.mxu0 0.0
    %213 = vmatpush1.msra.mxu0 0.0
    %214 = vmatprep.subr.mxu0 0.0
    %215 = vmatpush1.msra.mxu0 0.0
    %216 = vmatprep.subr.mxu0 0.0
    %217 = vmatpush1.msra.mxu0 0.0
    %218 = vmatprep.subr.mxu0 0.0
    %219 = vmatpush1.msra.mxu0 0.0
    %220 = vmatprep.subr.mxu0 0.0
    %221 = vmatpush1.msra.mxu0 0.0
    %222 = vmatprep.subr.mxu0 0.0
    %223 = vmatpush1.msra.mxu0 0.0
    %224 = vmatprep.subr.mxu0 0.0
    %225 = vmatpush1.msra.mxu0 0.0
    %226 = vmatprep.subr.mxu0 0.0
    %227 = vmatpush1.msra.mxu0 0.0
    %228 = vmatprep.subr.mxu0 0.0
    %229 = vmatpush1.msra.mxu0 0.0
    %230 = vmatprep.subr.mxu0 0.0
    %231 = vmatpush1.msra.mxu0 0.0
    %232 = vmatprep.subr.mxu0 0.0
    %233 = vmatpush1.msra.mxu0 0.0
    %234 = vmatprep.mubr.f32.mxu0 0.0
    %235 = vmatmul.mubr.f32.gmra.mrb[0].mxu0 %v88
    %v236 = vpop.f32.mrb[0].mxu0
    %v237 = vadd.f32 %v82, %v236
    %v238 = vpop.f32.mrb[0].mxu0
    %239 = vmatprep.mubr.f32.mxu0 0.0
    %240 = vmatmul.mubr.f32.gmra.mrb[0].mxu0 %v91
    %v241 = vpop.f32.mrb[0].mxu0
    %v242 = vadd.f32 %v82, %v241
    %v243 = vpop.f32.mrb[0].mxu0
    %244 = vdwg.mxu0
    %245 = vst [vmem:[#allocation7] sm:$0xff] %v160
    %246 = vst [vmem:[#allocation7 + $0x8] sm:$0xff] %v162
    %247 = vst.msk [vmem:[#allocation7 + $0x10] sm:$0xff] %vm86, %v237
    %248 = vst [vmem:[#allocation7 + $0x18] sm:$0xff] %v166
    %249 = vst [vmem:[#allocation7 + $0x20] sm:$0xff] %v168
    %250 = vst.msk [vmem:[#allocation7 + $0x28] sm:$0xff] %vm86, %v242
    // Predicated region
    $region22: #{tpu_custom_call.1} parent=1 // pred_check
      _
    $region23: #{tpu_custom_call.1} parent=1 // pred_check_branch
      %252 = sbr.rel (0) target = $region25
    $region24: #{tpu_custom_call.1} parent=1 // pred_region
      %s254 = ssub.s32 768, 768
      %255 = vsyncadd [#allocation4], %s254
      %s256 = sshll.u32 [#allocation7], 4
      %s257 = int_to_ptr.vmem [resolvable:$true] %s256
      %262 = dma.vmem_to_hbm [thread:$0]  %s257, 768, %s3, [#allocation4], 384, 384, 24
    $region25: #{tpu_custom_call.1} parent=1 // pred_fallthru
      _
    // Predicated region
    $region26: #{tpu_custom_call.1} parent=1 // pred_check
      _
    $region27: #{tpu_custom_call.1} parent=1 // pred_check_branch
      %264 = sbr.rel (0) target = $region29
    $region28: #{tpu_custom_call.1} parent=1 // pred_region
      %265 = dma.done [#allocation4], 768
    $region29: #{tpu_custom_call.1} parent=1 // pred_fallthru
      _
    %266 = vsyncpa [#allocation3], 1
    %267 = vsyncpa [#allocation6], 1
    %268 = vsyncpa [#allocation4], 1

</llo_original>
